<compile_context>
chip_gen: v5e
topology: v5e:2x2
jax: 0.10.0
libtpu: 0.0.40
codegen_flags: <defaults>
</compile_context>

<pallas_src>
import math

import jax
import jax.numpy as jnp
from jax.experimental import pallas as pl
from jax.experimental.pallas import tpu as pltpu


def _pick_tile_q(Lq: int) -> int:
    # Largest convenient Lq tile (multiple of 8) that evenly divides Lq.
    for t in (512, 256, 128, 64, 32, 16, 8):
        if Lq % t == 0:
            return t
    return Lq


def _make_cross_attention_kernel(n_heads: int, head_dim: int, embed_dim: int):

    def kernel(x_ref, y_ref, wq_ref, bq_ref, wkv_ref, bkv_ref, wo_ref, bo_ref,
               o_ref):
        # x_ref: (TQ, E)  y_ref: (Lk, C)
        # Weights were pre-transposed to (in, out), pre-cast to bf16, and the
        # 1/sqrt(d) scale was folded into Wq/bq in the wrapper; biases are
        # (1, out) f32.
        x_bf = x_ref[...].astype(jnp.bfloat16)            # (TQ, E)
        y_bf = y_ref[...].astype(jnp.bfloat16)            # (Lk, C)

        # Q projection (bf16 operands, f32 accumulation); scale already folded.
        q = jnp.dot(x_bf, wq_ref[...],
                    preferred_element_type=jnp.float32) + bq_ref[...]
        q_bf = q.astype(jnp.bfloat16)                     # (TQ, E)

        # Fused K|V projection: one (Lk, C) @ (C, 2E) matmul.
        kv = jnp.dot(y_bf, wkv_ref[...],
                     preferred_element_type=jnp.float32) + bkv_ref[...]
        k_bf = kv[:, :embed_dim].astype(jnp.bfloat16)     # (Lk, E)
        v_bf = kv[:, embed_dim:].astype(jnp.bfloat16)     # (Lk, E)

        d = head_dim

        # Per-head scores: contract last-with-last (A @ B^T on the MXU),
        # no explicit transpose.
        scores = []
        for h in range(n_heads):
            qh = q_bf[:, h * d:(h + 1) * d]               # (TQ, d)
            kh = k_bf[:, h * d:(h + 1) * d]               # (Lk, d)
            scores.append(jax.lax.dot_general(
                qh, kh,
                dimension_numbers=(((1,), (1,)), ((), ())),
                preferred_element_type=jnp.float32))      # (TQ, Lk) f32

        # softmax over the HEAD axis (dim=1 of the (b, h, Lq, Lk) tensor),
        # exactly as in the PyTorch reference.  All softmax math in f32.
        m = scores[0]
        for h in range(1, n_heads):
            m = jnp.maximum(m, scores[h])
        for h in range(n_heads):
            scores[h] = jnp.exp(scores[h] - m)            # overwrite in place
        denom = scores[0]
        for h in range(1, n_heads):
            denom = denom + scores[h]
        inv = pl.reciprocal(denom, approx=True)           # EUP slot, computed once

        # Per-head attention output, then ONE full-width out-projection matmul.
        o_heads = []
        for h in range(n_heads):
            attn_h = (scores[h] * inv).astype(jnp.bfloat16)          # (TQ, Lk)
            o_heads.append(jnp.dot(attn_h, v_bf[:, h * d:(h + 1) * d],
                                   preferred_element_type=jnp.float32))  # (TQ, d)
        o_cat = jnp.concatenate(o_heads, axis=1).astype(jnp.bfloat16)    # (TQ, E)

        out = jnp.dot(o_cat, wo_ref[...],
                      preferred_element_type=jnp.float32) + bo_ref[...]
        o_ref[...] = out.astype(o_ref.dtype)

    return kernel


def cross_attention(x, y, params, n_heads):
    """x: (B, Lq, E)  y: (B, Lk, C)  -> (B, Lq, E)"""
    B, Lq, E = x.shape
    _, Lk, C = y.shape
    head_dim = E // n_heads
    wq, bq, wk, bk, wv, bv, wo, bo = params

    # Glue (tiny, weight-sized ops done once per call outside the kernel):
    # pre-transpose weights to (in, out), cast matmul weights to bf16, fold
    # 1/sqrt(d) into Wq/bq, fuse K|V weights/biases, make biases 2D (1, out) f32.
    scale = 1.0 / math.sqrt(head_dim)
    wq_t = (wq.T * scale).astype(jnp.bfloat16)                          # (E, E)
    bq2 = (bq * scale).reshape(1, -1).astype(jnp.float32)
    wkv_t = jnp.concatenate([wk.T, wv.T], axis=1).astype(jnp.bfloat16)  # (C, 2E)
    bkv2 = jnp.concatenate([bk, bv]).reshape(1, -1).astype(jnp.float32)
    wo_t = wo.T.astype(jnp.bfloat16)                                    # (E, E)
    bo2 = bo.reshape(1, -1).astype(jnp.float32)

    tile_q = _pick_tile_q(Lq)
    grid = (B, Lq // tile_q)

    kernel = _make_cross_attention_kernel(n_heads, head_dim, E)
    wmap = lambda b, i: (0, 0)

    return pl.pallas_call(
        kernel,
        out_shape=jax.ShapeDtypeStruct((B, Lq, E), x.dtype),
        grid_spec=pltpu.PrefetchScalarGridSpec(
            num_scalar_prefetch=0,
            grid=grid,  # (batch, Lq tiles) — both parallel
            in_specs=[
                pl.BlockSpec((None, tile_q, E), lambda b, i: (b, i, 0)),  # x
                pl.BlockSpec((None, Lk, C), lambda b, i: (b, 0, 0)),      # y
                pl.BlockSpec((E, E), wmap),        # Wq^T * 1/sqrt(d) (bf16)
                pl.BlockSpec((1, E), wmap),        # bq * 1/sqrt(d)
                pl.BlockSpec((C, 2 * E), wmap),    # [Wk^T | Wv^T] (bf16)
                pl.BlockSpec((1, 2 * E), wmap),    # [bk | bv]
                pl.BlockSpec((E, E), wmap),        # Wo^T (bf16)
                pl.BlockSpec((1, E), wmap),        # bo
            ],
            out_specs=pl.BlockSpec((None, tile_q, E), lambda b, i: (b, i, 0)),
        ),
        compiler_params=pltpu.CompilerParams(
            dimension_semantics=("parallel", "parallel"),
            # Explicit scoped-VMEM budget with headroom for v7x's 64 MiB VMEM.
            vmem_limit_bytes=48 * 1024 * 1024,
        ),
    )(x, y, wq_t, bq2, wkv_t, bkv2, wo_t, bo2)


def cross_attention_reference(x, y, params, n_heads):
    """Pure-JAX (f32) mirror of the PyTorch forward (for correctness checking)."""
    wq, bq, wk, bk, wv, bv, wo, bo = params
    B, Lq, E = x.shape
    d = E // n_heads

    def split_heads(t):
        B_, L, _ = t.shape
        return t.reshape(B_, L, n_heads, d).transpose(0, 2, 1, 3)  # b h l d

    q = split_heads(x @ wq.T + bq)
    k = split_heads(y @ wk.T + bk)
    v = split_heads(y @ wv.T + bv)
    w = jnp.einsum('bhqd,bhkd->bhqk', q, k) / math.sqrt(d)
    s = jax.nn.softmax(w, axis=1)            # softmax over heads, as in reference
    o = jnp.einsum('bhqk,bhkd->bhqd', s, v)
    o = o.transpose(0, 2, 1, 3).reshape(B, Lq, E)
    return o @ wo.T + bo


if __name__ == "__main__":
    B, Lq, Lk = 2, 16, 8
    embed_dim, cross_dim, n_heads = 32, 16, 4

    key = jax.random.PRNGKey(0)
    keys = jax.random.split(key, 6)

    def linear_init(k, in_dim, out_dim):
        kw, kb = jax.random.split(k)
        bound = 1.0 / math.sqrt(in_dim)
        w = jax.random.uniform(kw, (out_dim, in_dim), jnp.float32, -bound, bound)
        b = jax.random.uniform(kb, (out_dim,), jnp.float32, -bound, bound)
        return w, b

    wq, bq = linear_init(keys[0], embed_dim, embed_dim)   # q_project
    wk, bk = linear_init(keys[1], cross_dim, embed_dim)   # k_project
    wv, bv = linear_init(keys[2], cross_dim, embed_dim)   # v_project
    wo, bo = linear_init(keys[3], embed_dim, embed_dim)   # out_project (assumed, see TODO)
    params = (wq, bq, wk, bk, wv, bv, wo, bo)

    x = jax.random.normal(keys[4], (B, Lq, embed_dim), jnp.float32)
    y = jax.random.normal(keys[5], (B, Lk, cross_dim), jnp.float32)

    out = jax.block_until_ready(cross_attention(x, y, params, n_heads))
    ref = cross_attention_reference(x, y, params, n_heads)
    assert out.shape == (B, Lq, embed_dim)
    # Matmul operands are bf16 (f32 accumulation) and the softmax reciprocal is
    # the EUP approx, so tolerances are looser than pure-f32 would allow.
    assert jnp.allclose(out, ref, rtol=2e-2, atol=2e-2), float(jnp.max(jnp.abs(out - ref)))

    print("KERNEL_OK")
</pallas_src>

<mosaic_0001>
module attributes {stable_mosaic.version = 11 : i64} {
  func.func @kernel(%arg0: i32, %arg1: i32, %arg2: memref<1x16x32xf32, #tpu.memory_space<vmem>>, %arg3: memref<1x8x16xf32, #tpu.memory_space<vmem>>, %arg4: memref<32x32xbf16, #tpu.memory_space<vmem>>, %arg5: memref<1x32xf32, #tpu.memory_space<vmem>>, %arg6: memref<16x64xbf16, #tpu.memory_space<vmem>>, %arg7: memref<1x64xf32, #tpu.memory_space<vmem>>, %arg8: memref<32x32xbf16, #tpu.memory_space<vmem>>, %arg9: memref<1x32xf32, #tpu.memory_space<vmem>>, %arg10: memref<1x16x32xf32, #tpu.memory_space<vmem>>) attributes {dimension_semantics = [#tpu.dimension_semantics<parallel>, #tpu.dimension_semantics<parallel>], iteration_bounds = array<i64: 2, 1>, scalar_prefetch = 0 : i64, scratch_operands = 0 : i64, tpu.core_type = #tpu.core_type<tc>, window_params = [{transform_indices = @transform_0, window_bounds = array<i64: 1, 16, 32>}, {transform_indices = @transform_1, window_bounds = array<i64: 1, 8, 16>}, {pipeline_mode = #tpu.pipeline_mode<synchronous>, transform_indices = @transform_2, window_bounds = array<i64: 32, 32>}, {pipeline_mode = #tpu.pipeline_mode<synchronous>, transform_indices = @transform_3, window_bounds = array<i64: 1, 32>}, {pipeline_mode = #tpu.pipeline_mode<synchronous>, transform_indices = @transform_4, window_bounds = array<i64: 16, 64>}, {pipeline_mode = #tpu.pipeline_mode<synchronous>, transform_indices = @transform_5, window_bounds = array<i64: 1, 64>}, {pipeline_mode = #tpu.pipeline_mode<synchronous>, transform_indices = @transform_6, window_bounds = array<i64: 32, 32>}, {pipeline_mode = #tpu.pipeline_mode<synchronous>, transform_indices = @transform_7, window_bounds = array<i64: 1, 32>}, {transform_indices = @transform_8, window_bounds = array<i64: 1, 16, 32>}]} {
    %c0 = arith.constant 0 : index
    %c0_0 = arith.constant 0 : index
    %c0_1 = arith.constant 0 : index
    %0 = vector.load %arg2[%c0, %c0_0, %c0_1] : memref<1x16x32xf32, #tpu.memory_space<vmem>>, vector<1x16x32xf32>
    %1 = vector.shape_cast %0 : vector<1x16x32xf32> to vector<16x32xf32>
    %2 = arith.truncf %1 : vector<16x32xf32> to vector<16x32xbf16>
    %c0_2 = arith.constant 0 : index
    %c0_3 = arith.constant 0 : index
    %c0_4 = arith.constant 0 : index
    %3 = vector.load %arg3[%c0_2, %c0_3, %c0_4] : memref<1x8x16xf32, #tpu.memory_space<vmem>>, vector<1x8x16xf32>
    %4 = vector.shape_cast %3 : vector<1x8x16xf32> to vector<8x16xf32>
    %5 = arith.truncf %4 : vector<8x16xf32> to vector<8x16xbf16>
    %c0_5 = arith.constant 0 : index
    %c0_6 = arith.constant 0 : index
    %6 = vector.load %arg4[%c0_5, %c0_6] : memref<32x32xbf16, #tpu.memory_space<vmem>>, vector<32x32xbf16>
    %cst = arith.constant dense<0.000000e+00> : vector<16x32xf32>
    %7 = tpu.matmul %2, %6, %cst {dimension_numbers = #tpu.dot_dimension_numbers<[1], [0], [0], [1], [0, 0, 1, 1], [], []>} : vector<16x32xbf16>, vector<32x32xbf16>, vector<16x32xf32> -> vector<16x32xf32>
    %c0_7 = arith.constant 0 : index
    %c0_8 = arith.constant 0 : index
    %8 = vector.load %arg5[%c0_7, %c0_8] : memref<1x32xf32, #tpu.memory_space<vmem>>, vector<1x32xf32>
    %9 = vector.broadcast %8 : vector<1x32xf32> to vector<16x32xf32>
    %10 = arith.addf %7, %9 : vector<16x32xf32>
    %11 = arith.truncf %10 : vector<16x32xf32> to vector<16x32xbf16>
    %c0_9 = arith.constant 0 : index
    %c0_10 = arith.constant 0 : index
    %12 = vector.load %arg6[%c0_9, %c0_10] : memref<16x64xbf16, #tpu.memory_space<vmem>>, vector<16x64xbf16>
    %cst_11 = arith.constant dense<0.000000e+00> : vector<8x64xf32>
    %13 = tpu.matmul %5, %12, %cst_11 {dimension_numbers = #tpu.dot_dimension_numbers<[1], [0], [0], [1], [0, 0, 1, 1], [], []>} : vector<8x16xbf16>, vector<16x64xbf16>, vector<8x64xf32> -> vector<8x64xf32>
    %c0_12 = arith.constant 0 : index
    %c0_13 = arith.constant 0 : index
    %14 = vector.load %arg7[%c0_12, %c0_13] : memref<1x64xf32, #tpu.memory_space<vmem>>, vector<1x64xf32>
    %15 = vector.broadcast %14 : vector<1x64xf32> to vector<8x64xf32>
    %16 = arith.addf %13, %15 : vector<8x64xf32>
    %17 = vector.extract_strided_slice %16 {offsets = [0, 0], sizes = [8, 32], strides = [1, 1]} : vector<8x64xf32> to vector<8x32xf32>
    %18 = arith.truncf %17 : vector<8x32xf32> to vector<8x32xbf16>
    %19 = vector.extract_strided_slice %16 {offsets = [0, 32], sizes = [8, 32], strides = [1, 1]} : vector<8x64xf32> to vector<8x32xf32>
    %20 = arith.truncf %19 : vector<8x32xf32> to vector<8x32xbf16>
    %21 = vector.extract_strided_slice %11 {offsets = [0, 0], sizes = [16, 8], strides = [1, 1]} : vector<16x32xbf16> to vector<16x8xbf16>
    %22 = vector.extract_strided_slice %18 {offsets = [0, 0], sizes = [8, 8], strides = [1, 1]} : vector<8x32xbf16> to vector<8x8xbf16>
    %cst_14 = arith.constant dense<0.000000e+00> : vector<16x8xf32>
    %23 = tpu.matmul %21, %22, %cst_14 {dimension_numbers = #tpu.dot_dimension_numbers<[1], [1], [0], [0], [0, 0, 1, 0], [], []>} : vector<16x8xbf16>, vector<8x8xbf16>, vector<16x8xf32> -> vector<16x8xf32>
    %24 = vector.extract_strided_slice %11 {offsets = [0, 8], sizes = [16, 8], strides = [1, 1]} : vector<16x32xbf16> to vector<16x8xbf16>
    %25 = vector.extract_strided_slice %18 {offsets = [0, 8], sizes = [8, 8], strides = [1, 1]} : vector<8x32xbf16> to vector<8x8xbf16>
    %cst_15 = arith.constant dense<0.000000e+00> : vector<16x8xf32>
    %26 = tpu.matmul %24, %25, %cst_15 {dimension_numbers = #tpu.dot_dimension_numbers<[1], [1], [0], [0], [0, 0, 1, 0], [], []>} : vector<16x8xbf16>, vector<8x8xbf16>, vector<16x8xf32> -> vector<16x8xf32>
    %27 = vector.extract_strided_slice %11 {offsets = [0, 16], sizes = [16, 8], strides = [1, 1]} : vector<16x32xbf16> to vector<16x8xbf16>
    %28 = vector.extract_strided_slice %18 {offsets = [0, 16], sizes = [8, 8], strides = [1, 1]} : vector<8x32xbf16> to vector<8x8xbf16>
    %cst_16 = arith.constant dense<0.000000e+00> : vector<16x8xf32>
    %29 = tpu.matmul %27, %28, %cst_16 {dimension_numbers = #tpu.dot_dimension_numbers<[1], [1], [0], [0], [0, 0, 1, 0], [], []>} : vector<16x8xbf16>, vector<8x8xbf16>, vector<16x8xf32> -> vector<16x8xf32>
    %30 = vector.extract_strided_slice %11 {offsets = [0, 24], sizes = [16, 8], strides = [1, 1]} : vector<16x32xbf16> to vector<16x8xbf16>
    %31 = vector.extract_strided_slice %18 {offsets = [0, 24], sizes = [8, 8], strides = [1, 1]} : vector<8x32xbf16> to vector<8x8xbf16>
    %cst_17 = arith.constant dense<0.000000e+00> : vector<16x8xf32>
    %32 = tpu.matmul %30, %31, %cst_17 {dimension_numbers = #tpu.dot_dimension_numbers<[1], [1], [0], [0], [0, 0, 1, 0], [], []>} : vector<16x8xbf16>, vector<8x8xbf16>, vector<16x8xf32> -> vector<16x8xf32>
    %33 = arith.maximumf %23, %26 : vector<16x8xf32>
    %34 = arith.maximumf %33, %29 : vector<16x8xf32>
    %35 = arith.maximumf %34, %32 : vector<16x8xf32>
    %36 = arith.subf %23, %35 : vector<16x8xf32>
    %37 = math.exp %36 : vector<16x8xf32>
    %38 = arith.subf %26, %35 : vector<16x8xf32>
    %39 = math.exp %38 : vector<16x8xf32>
    %40 = arith.subf %29, %35 : vector<16x8xf32>
    %41 = math.exp %40 : vector<16x8xf32>
    %42 = arith.subf %32, %35 : vector<16x8xf32>
    %43 = math.exp %42 : vector<16x8xf32>
    %44 = arith.addf %37, %39 : vector<16x8xf32>
    %45 = arith.addf %44, %41 : vector<16x8xf32>
    %46 = arith.addf %45, %43 : vector<16x8xf32>
    %47 = tpu.reciprocal %46 {approx = true} : vector<16x8xf32> -> vector<16x8xf32>
    %48 = arith.mulf %37, %47 : vector<16x8xf32>
    %49 = arith.truncf %48 : vector<16x8xf32> to vector<16x8xbf16>
    %50 = vector.extract_strided_slice %20 {offsets = [0, 0], sizes = [8, 8], strides = [1, 1]} : vector<8x32xbf16> to vector<8x8xbf16>
    %cst_18 = arith.constant dense<0.000000e+00> : vector<16x8xf32>
    %51 = tpu.matmul %49, %50, %cst_18 {dimension_numbers = #tpu.dot_dimension_numbers<[1], [0], [0], [1], [0, 0, 1, 1], [], []>} : vector<16x8xbf16>, vector<8x8xbf16>, vector<16x8xf32> -> vector<16x8xf32>
    %52 = arith.mulf %39, %47 : vector<16x8xf32>
    %53 = arith.truncf %52 : vector<16x8xf32> to vector<16x8xbf16>
    %54 = vector.extract_strided_slice %20 {offsets = [0, 8], sizes = [8, 8], strides = [1, 1]} : vector<8x32xbf16> to vector<8x8xbf16>
    %cst_19 = arith.constant dense<0.000000e+00> : vector<16x8xf32>
    %55 = tpu.matmul %53, %54, %cst_19 {dimension_numbers = #tpu.dot_dimension_numbers<[1], [0], [0], [1], [0, 0, 1, 1], [], []>} : vector<16x8xbf16>, vector<8x8xbf16>, vector<16x8xf32> -> vector<16x8xf32>
    %56 = arith.mulf %41, %47 : vector<16x8xf32>
    %57 = arith.truncf %56 : vector<16x8xf32> to vector<16x8xbf16>
    %58 = vector.extract_strided_slice %20 {offsets = [0, 16], sizes = [8, 8], strides = [1, 1]} : vector<8x32xbf16> to vector<8x8xbf16>
    %cst_20 = arith.constant dense<0.000000e+00> : vector<16x8xf32>
    %59 = tpu.matmul %57, %58, %cst_20 {dimension_numbers = #tpu.dot_dimension_numbers<[1], [0], [0], [1], [0, 0, 1, 1], [], []>} : vector<16x8xbf16>, vector<8x8xbf16>, vector<16x8xf32> -> vector<16x8xf32>
    %60 = arith.mulf %43, %47 : vector<16x8xf32>
    %61 = arith.truncf %60 : vector<16x8xf32> to vector<16x8xbf16>
    %62 = vector.extract_strided_slice %20 {offsets = [0, 24], sizes = [8, 8], strides = [1, 1]} : vector<8x32xbf16> to vector<8x8xbf16>
    %cst_21 = arith.constant dense<0.000000e+00> : vector<16x8xf32>
    %63 = tpu.matmul %61, %62, %cst_21 {dimension_numbers = #tpu.dot_dimension_numbers<[1], [0], [0], [1], [0, 0, 1, 1], [], []>} : vector<16x8xbf16>, vector<8x8xbf16>, vector<16x8xf32> -> vector<16x8xf32>
    %64 = tpu.concatenate %51, %55, %59, %63 in 1 : vector<16x8xf32>, vector<16x8xf32>, vector<16x8xf32>, vector<16x8xf32> -> vector<16x32xf32>
    %65 = arith.truncf %64 : vector<16x32xf32> to vector<16x32xbf16>
    %c0_22 = arith.constant 0 : index
    %c0_23 = arith.constant 0 : index
    %66 = vector.load %arg8[%c0_22, %c0_23] : memref<32x32xbf16, #tpu.memory_space<vmem>>, vector<32x32xbf16>
    %cst_24 = arith.constant dense<0.000000e+00> : vector<16x32xf32>
    %67 = tpu.matmul %65, %66, %cst_24 {dimension_numbers = #tpu.dot_dimension_numbers<[1], [0], [0], [1], [0, 0, 1, 1], [], []>} : vector<16x32xbf16>, vector<32x32xbf16>, vector<16x32xf32> -> vector<16x32xf32>
    %c0_25 = arith.constant 0 : index
    %c0_26 = arith.constant 0 : index
    %68 = vector.load %arg9[%c0_25, %c0_26] : memref<1x32xf32, #tpu.memory_space<vmem>>, vector<1x32xf32>
    %69 = vector.broadcast %68 : vector<1x32xf32> to vector<16x32xf32>
    %70 = arith.addf %67, %69 : vector<16x32xf32>
    %c0_27 = arith.constant 0 : index
    %c0_28 = arith.constant 0 : index
    %c0_29 = arith.constant 0 : index
    %71 = vector.load %arg10[%c0_27, %c0_28, %c0_29] : memref<1x16x32xf32, #tpu.memory_space<vmem>>, vector<1x16x32xf32>
    %72 = vector.shape_cast %71 : vector<1x16x32xf32> to vector<16x32xf32>
    %73 = vector.shape_cast %70 : vector<16x32xf32> to vector<1x16x32xf32>
    tpu.vector_store %arg10[%c0_27, %c0_28, %c0_29], %73 {strides = array<i32>} : memref<1x16x32xf32, #tpu.memory_space<vmem>>, vector<1x16x32xf32>,
    return
  }
  func.func @transform_0(%arg0: i32, %arg1: i32) -> (i32, i32, i32) {
    %c0_i32 = arith.constant 0 : i32
    %c0_i32_0 = arith.constant 0 : i32
    return %arg0, %arg1, %c0_i32 : i32, i32, i32
  }
  func.func @transform_1(%arg0: i32, %arg1: i32) -> (i32, i32, i32) {
    %c0_i32 = arith.constant 0 : i32
    %c0_i32_0 = arith.constant 0 : i32
    %c0_i32_1 = arith.constant 0 : i32
    return %arg0, %c0_i32, %c0_i32_0 : i32, i32, i32
  }
  func.func @transform_2(%arg0: i32, %arg1: i32) -> (i32, i32) {
    %c0_i32 = arith.constant 0 : i32
    %c0_i32_0 = arith.constant 0 : i32
    %c0_i32_1 = arith.constant 0 : i32
    return %c0_i32, %c0_i32_0 : i32, i32
  }
  func.func @transform_3(%arg0: i32, %arg1: i32) -> (i32, i32) {
    %c0_i32 = arith.constant 0 : i32
    %c0_i32_0 = arith.constant 0 : i32
    %c0_i32_1 = arith.constant 0 : i32
    return %c0_i32, %c0_i32_0 : i32, i32
  }
  func.func @transform_4(%arg0: i32, %arg1: i32) -> (i32, i32) {
    %c0_i32 = arith.constant 0 : i32
    %c0_i32_0 = arith.constant 0 : i32
    %c0_i32_1 = arith.constant 0 : i32
    return %c0_i32, %c0_i32_0 : i32, i32
  }
  func.func @transform_5(%arg0: i32, %arg1: i32) -> (i32, i32) {
    %c0_i32 = arith.constant 0 : i32
    %c0_i32_0 = arith.constant 0 : i32
    %c0_i32_1 = arith.constant 0 : i32
    return %c0_i32, %c0_i32_0 : i32, i32
  }
  func.func @transform_6(%arg0: i32, %arg1: i32) -> (i32, i32) {
    %c0_i32 = arith.constant 0 : i32
    %c0_i32_0 = arith.constant 0 : i32
    %c0_i32_1 = arith.constant 0 : i32
    return %c0_i32, %c0_i32_0 : i32, i32
  }
  func.func @transform_7(%arg0: i32, %arg1: i32) -> (i32, i32) {
    %c0_i32 = arith.constant 0 : i32
    %c0_i32_0 = arith.constant 0 : i32
    %c0_i32_1 = arith.constant 0 : i32
    return %c0_i32, %c0_i32_0 : i32, i32
  }
  func.func @transform_8(%arg0: i32, %arg1: i32) -> (i32, i32, i32) {
    %c0_i32 = arith.constant 0 : i32
    %c0_i32_0 = arith.constant 0 : i32
    return %arg0, %arg1, %c0_i32 : i32, i32, i32
  }
}

</mosaic_0001>

<llo_original>
// kernel: tpu_custom_call.1
$region0: #{tpu_custom_call.1}
  #allocation0 [shape = 'u32[]', space=smem, size = 0x4, offset = 0x4, fixed_abs, tag = 'smem constant byte address 0x4 - core index']
  #allocation1 [shape = 'u32[72,128]{1,0:T(1,128)}', space=vmem, size = 0x9000, scoped, tag = 'internal scratch']
  %s0 = inlined_call_operand.hbm [shape: f32[2,16,32], index: 0, kind: input, shape index: {}]
  %s1 = inlined_call_operand.hbm [shape: f32[2,8,16], index: 1, kind: input, shape index: {}]
  %s2 = inlined_call_operand.hbm [shape: bf16[32,32], index: 2, kind: input, shape index: {}]
  %s3 = inlined_call_operand.vmem [shape: f32[1,32], index: 3, kind: input, shape index: {}]
  %s4 = inlined_call_operand.hbm [shape: bf16[16,64], index: 4, kind: input, shape index: {}]
  %s5 = inlined_call_operand.vmem [shape: f32[1,64], index: 5, kind: input, shape index: {}]
  %s6 = inlined_call_operand.hbm [shape: bf16[32,32], index: 6, kind: input, shape index: {}]
  %s7 = inlined_call_operand.vmem [shape: f32[1,32], index: 7, kind: input, shape index: {}]
  %s8 = inlined_call_operand.hbm [shape: f32[2,16,32], index: 8, kind: output, shape index: {}]
  %s9 = sld [smem:[#allocation0]]
  $region85: #{tpu_custom_call.1} parent=0
    _
  %s11 = ssub.s32 1, %s9
  %s12 = scalar_select 0, %s11, %s9
  $region1: #{tpu_custom_call.1} parent=0
    #allocation2 [shape = 'u8[16384]{0}', space=vmem, size = 0x4000, scoped, tag = 'input window, operand 0']
    #allocation3 [shape = 's32[2]{0}', space=sflag, size = 0x8, scoped, tag = 'scoped memory for tpu_custom_call.1']
    #allocation4 [shape = 's32[2]{0}', space=sflag, size = 0x8, scoped, tag = 'scoped memory for tpu_custom_call.1']
    #allocation5 [shape = 'u8[8192]{0}', space=vmem, size = 0x2000, scoped, tag = 'input window, operand 1']
    #allocation6 [shape = 's32[2]{0}', space=sflag, size = 0x8, scoped, tag = 'scoped memory for tpu_custom_call.1']
    #allocation7 [shape = 'u8[8192]{0}', space=vmem, size = 0x2000, scoped, tag = 'input window, operand 2, single buffered']
    #allocation8 [shape = 'u8[4096]{0}', space=vmem, size = 0x1000, scoped, tag = 'input window, operand 4, single buffered']
    #allocation9 [shape = 's32[1]{0}', space=sflag, size = 0x4, scoped, tag = 'scoped memory for tpu_custom_call.1']
    #allocation10 [shape = 'u8[8192]{0}', space=vmem, size = 0x2000, scoped, tag = 'input window, operand 6, single buffered']
    #allocation11 [shape = 'u8[16384]{0}', space=vmem, size = 0x4000, scoped, tag = 'output window, operand 0']
    %13 = vsyncpa [#allocation3], 0
    %s14 = scalar_lea.sflag [#allocation3], 1
    %15 = vsyncpa %s14, 0
    %16 = vsyncpa [#allocation6], 0
    %s17 = scalar_lea.sflag [#allocation6], 1
    %18 = vsyncpa %s17, 0
    %19 = vsyncpa [#allocation9], 0
    %20 = vsyncpa [#allocation4], 0
    %s21 = scalar_lea.sflag [#allocation4], 1
    %22 = vsyncpa %s21, 0
    loop: start=0, step=1, limit=4
    $region2: #{tpu_custom_call.1} parent=1 // loop_pre_header
      _
    $region3: #{tpu_custom_call.1} parent=1 // loop_header
      %s24 = sphi 0, %s28
      %p25 = scmp.ge.s32.totalorder %s24, 4
      %s31 = sphi 0, %s43
      %s32 = sphi 0, %s39
      %s33 = sphi 0, %s31
      %s34 = sphi 0, %s32
      %s35 = sphi 0, %s33
      %s36 = sphi 0, %s34
      %s48 = sphi 0, %s50
      %s51 = sphi 0, %s48
      %s52 = sphi 0, %s51
      %s68 = sphi 0, %s52
      %s74 = sphi 0, %s76
      %s77 = sphi 0, %s74
      %s78 = sphi 0, %s77
      %s94 = sphi 0, %s78
      %s98 = sphi 0, %s98
      %s100 = sphi 0, %s98
      %s101 = sphi 0, %s100
      %s115 = sphi 0, %s101
      %s119 = sphi 0, %s119
      %s121 = sphi 0, %s119
      %s122 = sphi 0, %s121
      %s136 = sphi 0, %s122
      %s140 = sphi 0, %s140
      %s142 = sphi 0, %s140
      %s143 = sphi 0, %s142
      %s157 = sphi 0, %s143
      %s161 = sphi 0, %s161
      %s163 = sphi 0, %s161
      %s164 = sphi 0, %s163
      %s178 = sphi 0, %s164
      %s182 = sphi 0, %s182
      %s184 = sphi 0, %s182
      %s185 = sphi 0, %s184
      %s199 = sphi 0, %s185
      %s203 = sphi 0, %s203
      %s205 = sphi 0, %s203
      %s206 = sphi 0, %s205
      %s220 = sphi 0, %s206
      %s228 = sphi 0, %s230
      %s231 = sphi 0, %s228
      %s232 = sphi 0, %s231
      %s248 = sphi 0, %s232
    $region4: #{tpu_custom_call.1} parent=1 // loop_header_branch
      %27 = sbr.rel (%p25) target = $region8
    $region5: #{tpu_custom_call.1} parent=1 // loop_body
      %s29 = ssub.s32 %s24, 1
      %s30 = ssub.s32 %s24, 2
      %s37 = sadd.s32 1, %s32
      %p38 = scmp.ge.s32.totalorder %s37, 1
      %s39 = scalar_select %p38, 0, %s37
      %s40 = sadd.s32 1, %s31
      %s41 = scalar_select %p38, %s40, %s31
      %p42 = scmp.ge.s32.totalorder %s41, 2
      %s43 = scalar_select %p42, 0, %s41
      %s44 = ssub.s32 %s31, %s43
      %s45 = ssub.s32 %s32, %s39
      %s46 = sor.u32 %s44, %s45
      %p47 = scmp.eq.s32.totalorder %s46, 0
      %s49 = sadd.s32 %s48, 1
      %s50 = scalar_select %p47, %s48, %s49
      %p53 = pneg %p47
      %p54 = scmp.eq.s32.totalorder %s24, 1
      %p55 = por %p53, %p54
      %p56 = scmp.ne.s32.totalorder %s48, %s51
      %p57 = scmp.eq.s32.totalorder %s24, 0
      %p58 = por %p56, %p57
      %p59 = scmp.ne.s32.totalorder %s48, %s51
      %p60 = scmp.eq.s32.totalorder %s29, 1
      %p61 = por %p59, %p60
      %p62 = scmp.ne.s32.totalorder %s51, %s52
      %p63 = scmp.eq.s32.totalorder %s29, 0
      %p64 = por %p62, %p63
      %p65 = scmp.ne.s32.totalorder %s51, %s52
      %p66 = scmp.eq.s32.totalorder %s30, 1
      %p67 = por %p65, %p66
      %p69 = scmp.ne.s32.totalorder %s52, %s68
      %p70 = scmp.eq.s32.totalorder %s30, 0
      %p71 = por %p69, %p70
      %s72 = ssub.s32 %s31, %s43
      %p73 = scmp.eq.s32.totalorder %s72, 0
      %s75 = sadd.s32 %s74, 1
      %s76 = scalar_select %p73, %s74, %s75
      %p79 = pneg %p73
      %p80 = scmp.eq.s32.totalorder %s24, 1
      %p81 = por %p79, %p80
      %p82 = scmp.ne.s32.totalorder %s74, %s77
      %p83 = scmp.eq.s32.totalorder %s24, 0
      %p84 = por %p82, %p83
      %p85 = scmp.ne.s32.totalorder %s74, %s77
      %p86 = scmp.eq.s32.totalorder %s29, 1
      %p87 = por %p85, %p86
      %p88 = scmp.ne.s32.totalorder %s77, %s78
      %p89 = scmp.eq.s32.totalorder %s29, 0
      %p90 = por %p88, %p89
      %p91 = scmp.ne.s32.totalorder %s77, %s78
      %p92 = scmp.eq.s32.totalorder %s30, 1
      %p93 = por %p91, %p92
      %p95 = scmp.ne.s32.totalorder %s78, %s94
      %p96 = scmp.eq.s32.totalorder %s30, 0
      %p97 = por %p95, %p96
      %s99 = sadd.s32 %s98, 1
      %p102 = scmp.eq.s32.totalorder %s24, 1
      %p103 = scmp.ne.s32.totalorder %s98, %s100
      %p104 = scmp.eq.s32.totalorder %s24, 0
      %p105 = por %p103, %p104
      %p106 = scmp.ne.s32.totalorder %s98, %s100
      %p107 = scmp.eq.s32.totalorder %s29, 1
      %p108 = por %p106, %p107
      %p109 = scmp.ne.s32.totalorder %s100, %s101
      %p110 = scmp.eq.s32.totalorder %s29, 0
      %p111 = por %p109, %p110
      %p112 = scmp.ne.s32.totalorder %s100, %s101
      %p113 = scmp.eq.s32.totalorder %s30, 1
      %p114 = por %p112, %p113
      %p116 = scmp.ne.s32.totalorder %s101, %s115
      %p117 = scmp.eq.s32.totalorder %s30, 0
      %p118 = por %p116, %p117
      %s120 = sadd.s32 %s119, 1
      %p123 = scmp.eq.s32.totalorder %s24, 1
      %p124 = scmp.ne.s32.totalorder %s119, %s121
      %p125 = scmp.eq.s32.totalorder %s24, 0
      %p126 = por %p124, %p125
      %p127 = scmp.ne.s32.totalorder %s119, %s121
      %p128 = scmp.eq.s32.totalorder %s29, 1
      %p129 = por %p127, %p128
      %p130 = scmp.ne.s32.totalorder %s121, %s122
      %p131 = scmp.eq.s32.totalorder %s29, 0
      %p132 = por %p130, %p131
      %p133 = scmp.ne.s32.totalorder %s121, %s122
      %p134 = scmp.eq.s32.totalorder %s30, 1
      %p135 = por %p133, %p134
      %p137 = scmp.ne.s32.totalorder %s122, %s136
      %p138 = scmp.eq.s32.totalorder %s30, 0
      %p139 = por %p137, %p138
      %s141 = sadd.s32 %s140, 1
      %p144 = scmp.eq.s32.totalorder %s24, 1
      %p145 = scmp.ne.s32.totalorder %s140, %s142
      %p146 = scmp.eq.s32.totalorder %s24, 0
      %p147 = por %p145, %p146
      %p148 = scmp.ne.s32.totalorder %s140, %s142
      %p149 = scmp.eq.s32.totalorder %s29, 1
      %p150 = por %p148, %p149
      %p151 = scmp.ne.s32.totalorder %s142, %s143
      %p152 = scmp.eq.s32.totalorder %s29, 0
      %p153 = por %p151, %p152
      %p154 = scmp.ne.s32.totalorder %s142, %s143
      %p155 = scmp.eq.s32.totalorder %s30, 1
      %p156 = por %p154, %p155
      %p158 = scmp.ne.s32.totalorder %s143, %s157
      %p159 = scmp.eq.s32.totalorder %s30, 0
      %p160 = por %p158, %p159
      %s162 = sadd.s32 %s161, 1
      %p165 = scmp.eq.s32.totalorder %s24, 1
      %p166 = scmp.ne.s32.totalorder %s161, %s163
      %p167 = scmp.eq.s32.totalorder %s24, 0
      %p168 = por %p166, %p167
      %p169 = scmp.ne.s32.totalorder %s161, %s163
      %p170 = scmp.eq.s32.totalorder %s29, 1
      %p171 = por %p169, %p170
      %p172 = scmp.ne.s32.totalorder %s163, %s164
      %p173 = scmp.eq.s32.totalorder %s29, 0
      %p174 = por %p172, %p173
      %p175 = scmp.ne.s32.totalorder %s163, %s164
      %p176 = scmp.eq.s32.totalorder %s30, 1
      %p177 = por %p175, %p176
      %p179 = scmp.ne.s32.totalorder %s164, %s178
      %p180 = scmp.eq.s32.totalorder %s30, 0
      %p181 = por %p179, %p180
      %s183 = sadd.s32 %s182, 1
      %p186 = scmp.eq.s32.totalorder %s24, 1
      %p187 = scmp.ne.s32.totalorder %s182, %s184
      %p188 = scmp.eq.s32.totalorder %s24, 0
      %p189 = por %p187, %p188
      %p190 = scmp.ne.s32.totalorder %s182, %s184
      %p191 = scmp.eq.s32.totalorder %s29, 1
      %p192 = por %p190, %p191
      %p193 = scmp.ne.s32.totalorder %s184, %s185
      %p194 = scmp.eq.s32.totalorder %s29, 0
      %p195 = por %p193, %p194
      %p196 = scmp.ne.s32.totalorder %s184, %s185
      %p197 = scmp.eq.s32.totalorder %s30, 1
      %p198 = por %p196, %p197
      %p200 = scmp.ne.s32.totalorder %s185, %s199
      %p201 = scmp.eq.s32.totalorder %s30, 0
      %p202 = por %p200, %p201
      %s204 = sadd.s32 %s203, 1
      %p207 = scmp.eq.s32.totalorder %s24, 1
      %p208 = scmp.ne.s32.totalorder %s203, %s205
      %p209 = scmp.eq.s32.totalorder %s24, 0
      %p210 = por %p208, %p209
      %p211 = scmp.ne.s32.totalorder %s203, %s205
      %p212 = scmp.eq.s32.totalorder %s29, 1
      %p213 = por %p211, %p212
      %p214 = scmp.ne.s32.totalorder %s205, %s206
      %p215 = scmp.eq.s32.totalorder %s29, 0
      %p216 = por %p214, %p215
      %p217 = scmp.ne.s32.totalorder %s205, %s206
      %p218 = scmp.eq.s32.totalorder %s30, 1
      %p219 = por %p217, %p218
      %p221 = scmp.ne.s32.totalorder %s206, %s220
      %p222 = scmp.eq.s32.totalorder %s30, 0
      %p223 = por %p221, %p222
      %s224 = ssub.s32 %s31, %s43
      %s225 = ssub.s32 %s32, %s39
      %s226 = sor.u32 %s224, %s225
      %p227 = scmp.eq.s32.totalorder %s226, 0
      %s229 = sadd.s32 %s228, 1
      %s230 = scalar_select %p227, %s228, %s229
      %p233 = pneg %p227
      %p234 = scmp.eq.s32.totalorder %s24, 1
      %p235 = por %p233, %p234
      %p236 = scmp.ne.s32.totalorder %s228, %s231
      %p237 = scmp.eq.s32.totalorder %s24, 0
      %p238 = por %p236, %p237
      %p239 = scmp.ne.s32.totalorder %s228, %s231
      %p240 = scmp.eq.s32.totalorder %s29, 1
      %p241 = por %p239, %p240
      %p242 = scmp.ne.s32.totalorder %s231, %s232
      %p243 = scmp.eq.s32.totalorder %s29, 0
      %p244 = por %p242, %p243
      %p245 = scmp.ne.s32.totalorder %s231, %s232
      %p246 = scmp.eq.s32.totalorder %s30, 1
      %p247 = por %p245, %p246
      %p249 = scmp.ne.s32.totalorder %s232, %s248
      %p250 = scmp.eq.s32.totalorder %s30, 0
      %p251 = por %p249, %p250
      %p252 = scmp.le.s32.totalorder 1, %s24
      %p253 = scmp.lt.s32.totalorder %s24, 3
      %p254 = pnand %p252, %p253
      %p255 = pneg %p254
      // Predicated region
      $region9: #{tpu_custom_call.1} parent=5 // pred_check
        _
      $region10: #{tpu_custom_call.1} parent=5 // pred_check_branch
        %257 = sbr.rel (%p254) target = $region12
      $region11: #{tpu_custom_call.1} parent=5 // pred_region
        %s258 = ssub.s32 %s24, 1
        // Predicated region
        $region13: #{tpu_custom_call.1} parent=11 // pred_check
          %p259 = pneg %p111
        $region14: #{tpu_custom_call.1} parent=11 // pred_check_branch
          %261 = sbr.rel (%p259) target = $region16
        $region15: #{tpu_custom_call.1} parent=11 // pred_region
          %263 = vsyncadd [#allocation6], 0
          %s264 = sshll.u32 %s2, 4
          %s265 = int_to_ptr.hbm [resolvable:$true] %s264
          %s266 = sshll.u32 [#allocation7], 4
          %s267 = int_to_ptr.vmem [resolvable:$true] %s266
          %272 = dma.hbm_to_vmem [thread:$0]  %s265, 256, %s267, [#allocation6], 64, 64, 4
        $region16: #{tpu_custom_call.1} parent=11 // pred_fallthru
          _
        // Predicated region
        $region17: #{tpu_custom_call.1} parent=11 // pred_check
          %p273 = pneg %p132
        $region18: #{tpu_custom_call.1} parent=11 // pred_check_branch
          %275 = sbr.rel (%p273) target = $region20
        $region19: #{tpu_custom_call.1} parent=11 // pred_region
          _
        $region20: #{tpu_custom_call.1} parent=11 // pred_fallthru
          _
        // Predicated region
        $region21: #{tpu_custom_call.1} parent=11 // pred_check
          %p276 = pneg %p153
        $region22: #{tpu_custom_call.1} parent=11 // pred_check_branch
          %278 = sbr.rel (%p276) target = $region24
        $region23: #{tpu_custom_call.1} parent=11 // pred_region
          %280 = vsyncadd [#allocation9], 0
          %s281 = sshll.u32 %s4, 4
          %s282 = int_to_ptr.hbm [resolvable:$true] %s281
          %s283 = sshll.u32 [#allocation8], 4
          %s284 = int_to_ptr.vmem [resolvable:$true] %s283
          %289 = dma.hbm_to_vmem [thread:$0]  %s282, 128, %s284, [#allocation9], 64, 64, 4
        $region24: #{tpu_custom_call.1} parent=11 // pred_fallthru
          _
        // Predicated region
        $region25: #{tpu_custom_call.1} parent=11 // pred_check
          %p290 = pneg %p174
        $region26: #{tpu_custom_call.1} parent=11 // pred_check_branch
          %292 = sbr.rel (%p290) target = $region28
        $region27: #{tpu_custom_call.1} parent=11 // pred_region
          _
        $region28: #{tpu_custom_call.1} parent=11 // pred_fallthru
          _
        // Predicated region
        $region29: #{tpu_custom_call.1} parent=11 // pred_check
          %p293 = pneg %p195
        $region30: #{tpu_custom_call.1} parent=11 // pred_check_branch
          %295 = sbr.rel (%p293) target = $region32
        $region31: #{tpu_custom_call.1} parent=11 // pred_region
          %297 = vsyncadd [#allocation9], 0
          %s298 = sshll.u32 %s6, 4
          %s299 = int_to_ptr.hbm [resolvable:$true] %s298
          %s300 = sshll.u32 [#allocation10], 4
          %s301 = int_to_ptr.vmem [resolvable:$true] %s300
          %306 = dma.hbm_to_vmem [thread:$0]  %s299, 256, %s301, [#allocation9], 64, 64, 4
        $region32: #{tpu_custom_call.1} parent=11 // pred_fallthru
          _
        // Predicated region
        $region33: #{tpu_custom_call.1} parent=11 // pred_check
          %p307 = pneg %p216
        $region34: #{tpu_custom_call.1} parent=11 // pred_check_branch
          %309 = sbr.rel (%p307) target = $region36
        $region35: #{tpu_custom_call.1} parent=11 // pred_region
          _
        $region36: #{tpu_custom_call.1} parent=11 // pred_fallthru
          _
      $region12: #{tpu_custom_call.1} parent=5 // pred_fallthru
        _
      %p310 = scmp.lt.s32.totalorder %s24, 2
      // Predicated region
      $region37: #{tpu_custom_call.1} parent=5 // pred_check
        %p311 = pneg %p310
      $region38: #{tpu_custom_call.1} parent=5 // pred_check_branch
        %313 = sbr.rel (%p311) target = $region40
      $region39: #{tpu_custom_call.1} parent=5 // pred_region
        // Predicated region
        $region41: #{tpu_custom_call.1} parent=39 // pred_check
          %p314 = pneg %p58
        $region42: #{tpu_custom_call.1} parent=39 // pred_check_branch
          %316 = sbr.rel (%p314) target = $region44
        $region43: #{tpu_custom_call.1} parent=39 // pred_region
          %s317 = sand.u32 %s48, 1
          %s318 = scalar_lea.sflag [#allocation3], %s317
          %s319 = sand.u32 %s48, 1
          %s320 = smul.addr %s319, 16
          %s321 = scalar_lea.vmem [#allocation2], %s320
          %s322 = smul.u32 2, %s32
          %324 = vsyncadd %s318, 0
          %s325 = smul.addr %s31, 2
          %s326 = sadd.s32 %s322, %s325
          %s327 = smul.addr %s326, 8
          %s328 = scalar_lea.hbm %s0, %s327
          %s329 = sshll.u32 %s328, 4
          %s330 = int_to_ptr.hbm [resolvable:$true] %s329
          %s331 = sshll.u32 %s321, 4
          %s332 = int_to_ptr.vmem [resolvable:$true] %s331
          %337 = dma.hbm_to_vmem [thread:$0]  %s330, 256, %s332, %s318, 128, 128, 8
        $region44: #{tpu_custom_call.1} parent=39 // pred_fallthru
          _
        // Predicated region
        $region45: #{tpu_custom_call.1} parent=39 // pred_check
          %p338 = pneg %p84
        $region46: #{tpu_custom_call.1} parent=39 // pred_check_branch
          %340 = sbr.rel (%p338) target = $region48
        $region47: #{tpu_custom_call.1} parent=39 // pred_region
          %s341 = sand.u32 %s24, 1
          %s342 = scalar_lea.sflag [#allocation6], %s341
          %s343 = sand.u32 %s74, 1
          %s344 = smul.addr %s343, 8
          %s345 = scalar_lea.vmem [#allocation5], %s344
          %347 = vsyncadd %s342, 0
          %s348 = smul.addr %s31, 8
          %s349 = scalar_lea.hbm %s1, %s348
          %s351 = sshll.u32 %s349, 4
          %s352 = int_to_ptr.hbm [resolvable:$true] %s351
          %s353 = sshll.u32 %s345, 4
          %s354 = int_to_ptr.vmem [resolvable:$true] %s353
          %356 = dma.hbm_to_vmem [thread:$0]  %s352, 128, %s354, %s342
        $region48: #{tpu_custom_call.1} parent=39 // pred_fallthru
          _
      $region40: #{tpu_custom_call.1} parent=5 // pred_fallthru
        _
      %p357 = scmp.le.s32.totalorder 1, %s24
      %p358 = scmp.lt.s32.totalorder %s24, 3
      %p359 = pnand %p357, %p358
      %p360 = pneg %p359
      // Predicated region
      $region49: #{tpu_custom_call.1} parent=5 // pred_check
        _
      $region50: #{tpu_custom_call.1} parent=5 // pred_check_branch
        %362 = sbr.rel (%p359) target = $region52
      $region51: #{tpu_custom_call.1} parent=5 // pred_region
        %s363 = ssub.s32 %s24, 1
        %s364 = sand.u32 %s51, 1
        %s365 = scalar_lea.sflag [#allocation3], %s364
        %s366 = sand.u32 %s51, 1
        %s367 = smul.addr %s366, 16
        %s368 = scalar_lea.vmem [#allocation2], %s367
        // Predicated region
        $region53: #{tpu_custom_call.1} parent=51 // pred_check
          %p369 = pneg %p64
        $region54: #{tpu_custom_call.1} parent=51 // pred_check_branch
          %371 = sbr.rel (%p369) target = $region56
        $region55: #{tpu_custom_call.1} parent=51 // pred_region
          %373 = dma.done %s365, 256
        $region56: #{tpu_custom_call.1} parent=51 // pred_fallthru
          _
        %s374 = sand.u32 %s29, 1
        %s375 = scalar_lea.sflag [#allocation6], %s374
        %s376 = sand.u32 %s77, 1
        %s377 = smul.addr %s376, 8
        %s378 = scalar_lea.vmem [#allocation5], %s377
        // Predicated region
        $region57: #{tpu_custom_call.1} parent=51 // pred_check
          %p379 = pneg %p90
        $region58: #{tpu_custom_call.1} parent=51 // pred_check_branch
          %381 = sbr.rel (%p379) target = $region60
        $region59: #{tpu_custom_call.1} parent=51 // pred_region
          %383 = dma.done %s375, 128
        $region60: #{tpu_custom_call.1} parent=51 // pred_fallthru
          _
        // Predicated region
        $region61: #{tpu_custom_call.1} parent=51 // pred_check
          %p384 = pneg %p111
        $region62: #{tpu_custom_call.1} parent=51 // pred_check_branch
          %386 = sbr.rel (%p384) target = $region64
        $region63: #{tpu_custom_call.1} parent=51 // pred_region
          %388 = dma.done [#allocation6], 256
        $region64: #{tpu_custom_call.1} parent=51 // pred_fallthru
          _
        // Predicated region
        $region65: #{tpu_custom_call.1} parent=51 // pred_check
          %p389 = pneg %p153
        $region66: #{tpu_custom_call.1} parent=51 // pred_check_branch
          %391 = sbr.rel (%p389) target = $region68
        $region67: #{tpu_custom_call.1} parent=51 // pred_region
          %393 = dma.done [#allocation9], 128
        $region68: #{tpu_custom_call.1} parent=51 // pred_fallthru
          _
        // Predicated region
        $region69: #{tpu_custom_call.1} parent=51 // pred_check
          %p394 = pneg %p195
        $region70: #{tpu_custom_call.1} parent=51 // pred_check_branch
          %396 = sbr.rel (%p394) target = $region72
        $region71: #{tpu_custom_call.1} parent=51 // pred_region
          %398 = dma.done [#allocation9], 256
        $region72: #{tpu_custom_call.1} parent=51 // pred_fallthru
          _
        %s399 = sand.u32 %s51, 1
        %s400 = scalar_lea.sflag [#allocation3], %s399
        %s401 = sand.u32 %s51, 1
        %s402 = smul.addr %s401, 16
        %s403 = scalar_lea.vmem [#allocation2], %s402
        %p404 = pneg %p64
        %p405 = pneg %p61
        %s406 = sand.u32 %s29, 1
        %s407 = scalar_lea.sflag [#allocation6], %s406
        %s408 = sand.u32 %s77, 1
        %s409 = smul.addr %s408, 8
        %s410 = scalar_lea.vmem [#allocation5], %s409
        %p411 = pneg %p90
        %p412 = pneg %p87
        %p413 = pneg %p111
        %p414 = pneg %p108
        %p415 = pneg %p132
        %p416 = pneg %p129
        %p417 = pneg %p153
        %p418 = pneg %p150
        %p419 = pneg %p174
        %p420 = pneg %p171
        %p421 = pneg %p195
        %p422 = pneg %p192
        %p423 = pneg %p216
        %p424 = pneg %p213
        %p425 = pneg %p244
        %p426 = pneg %p241
        %s427 = sand.u32 %s231, 1
        %s428 = scalar_lea.sflag [#allocation4], %s427
        %s429 = sand.u32 %s231, 1
        %s430 = smul.addr %s429, 16
        %s431 = scalar_lea.vmem [#allocation11], %s430
        %s432 = smul.u32 2, %s34
        %s433 = smul.u32 2, %s34
        %v435 = vld [vmem:[%s368] sm:$0xff]
        %v436 = vld [vmem:[%s368 + $0x8] sm:$0xff]
        %v437 = vpack.c.bf16 %v436, %v435
        %v438 = vld [vmem:[%s378] sm:$0xff]
        %v439 = vpack.c.bf16 %v438, %v438
        %v440 = vld [vmem:[#allocation7] sm:$0xf]
        %v441 = vld [vmem:[#allocation7 + $0x4] sm:$0xf]
        %v442 = vld [vmem:[#allocation7 + $0x8] sm:$0xf]
        %v443 = vld [vmem:[#allocation7 + $0xc] sm:$0xf]
        %v444 = vld [vmem:[%s3] sm:$0x1]
        %v446 = vperm.slane %v444, 0
        %v452 = vunpack.c.l.b16 %v440
        %v453 = vunpack.c.l.b16 %v441
        %v454 = vunpack.c.l.b16 %v442
        %v455 = vunpack.c.l.b16 %v443
        %v456 = vpack.c.b16 %v453, %v452
        %v457 = vpack.c.b16 %v455, %v454
        %vm460 = vcmask 261120
        %v462 = vsel %vm460, %v437, 0
        %464 = vmatpush.bf16.msra.mxu0 0
        %465 = vmatpush.bf16.msra.mxu0 0
        %466 = vmatpush.bf16.msra.mxu0 0
        %467 = vmatpush.bf16.msra.mxu0 0
        %468 = vmatpush.bf16.msra.mxu0 0
        %469 = vmatpush.bf16.msra.mxu0 0
        %470 = vmatpush.bf16.msra.mxu0 %v457
        %471 = vmatpush.bf16.msra.mxu0 %v456
        %472 = vmatmul.bf16.gmra.mxu0 %v462
        %v473 = vpop.f32.mrf.mxu0
        %v474 = vadd.f32 %v446, %v473
        %v475 = vpop.f32.mrf.mxu0
        %v476 = vadd.f32 %v446, %v475
        %477 = vdwg.mxu0
        %v478 = vpack.c.bf16 %v474, %v474
        %v479 = vpack.c.bf16 %v476, %v476
        %v480 = vld [vmem:[#allocation8] sm:$0xf]
        %v481 = vld [vmem:[#allocation8 + $0x4] sm:$0xf]
        %v482 = vld [vmem:[%s5] sm:$0x1]
        %v484 = vperm.slane %v482, 0
        %v488 = vunpack.c.l.b16 %v480
        %v489 = vunpack.c.l.b16 %v481
        %v490 = vpack.c.b16 %v489, %v488
        %vm492 = vcmask 130048
        %v494 = vsel %vm492, %v439, 0
        %496 = vmatpush.bf16.msra.mxu0 0
        %497 = vmatpush.bf16.msra.mxu0 0
        %498 = vmatpush.bf16.msra.mxu0 0
        %499 = vmatpush.bf16.msra.mxu0 0
        %500 = vmatpush.bf16.msra.mxu0 0
        %501 = vmatpush.bf16.msra.mxu0 0
        %502 = vmatpush.bf16.msra.mxu0 0
        %503 = vmatpush.bf16.msra.mxu0 %v490
        %504 = vmatmul.bf16.gmra.mxu0 %v494
        %v505 = vpop.f32.mrf.mxu0
        %v506 = vadd.f32 %v484, %v505
        %v507 = vpop.f32.mrf.mxu0
        %508 = vdwg.mxu0
        %v509 = vpack.c.bf16 %v506, %v506
        %v512 = vunpack.c.l.b16 %v478
        %v513 = vunpack.c.l.b16 %v479
        %v514 = vpack.c.b16 %v513, %v512
        %vm515 = vcmask 64512
        %v517 = vsel %vm515, %v514, 0
        %v520 = vsel %vm515, %v509, 0
        %522 = vmatpush.bf16.xpose.msra.mxu0 0
        %523 = vmatpush.bf16.xpose.msra.mxu0 0
        %524 = vmatpush.bf16.xpose.msra.mxu0 0
        %525 = vmatpush.bf16.xpose.msra.mxu0 0
        %526 = vmatpush.bf16.xpose.msra.mxu0 0
        %527 = vmatpush.bf16.xpose.msra.mxu0 0
        %528 = vmatpush.bf16.xpose.msra.mxu0 0
        %529 = vmatpush.bf16.xpose.msra.mxu0 %v520
        %530 = vmatmul.bf16.gmra.mxu0 %v517
        %v531 = vpop.f32.mrf.mxu0
        %v532 = vadd.f32 0.0, %v531
        %v533 = vpop.f32.mrf.mxu0
        %v534 = vadd.f32 0.0, %v533
        %535 = vdwg.mxu0
        %536 = vrot.lane.b32.xlu0 %v514, 120
        %v537 = vpop.permute.xlu0 %536
        %v539 = vunpack.c.l.b16 %v509
        %v540 = vpack.c.b16 %v539, %v539
        %541 = vrot.lane.b32.xlu0 %v540, 120
        %v542 = vpop.permute.xlu0 %541
        %v544 = vsel %vm515, %v537, 0
        %v547 = vsel %vm515, %v542, 0
        %549 = vmatpush.bf16.xpose.msra.mxu0 0
        %550 = vmatpush.bf16.xpose.msra.mxu0 0
        %551 = vmatpush.bf16.xpose.msra.mxu0 0
        %552 = vmatpush.bf16.xpose.msra.mxu0 0
        %553 = vmatpush.bf16.xpose.msra.mxu0 0
        %554 = vmatpush.bf16.xpose.msra.mxu0 0
        %555 = vmatpush.bf16.xpose.msra.mxu0 0
        %556 = vmatpush.bf16.xpose.msra.mxu0 %v547
        %557 = vmatmul.bf16.gmra.mxu0 %v544
        %v558 = vpop.f32.mrf.mxu0
        %v559 = vadd.f32 0.0, %v558
        %v560 = vpop.f32.mrf.mxu0
        %v561 = vadd.f32 0.0, %v560
        %562 = vdwg.mxu0
        %563 = vrot.lane.b32.xlu0 %v514, 112
        %v564 = vpop.permute.xlu0 %563
        %565 = vrot.lane.b32.xlu0 %v540, 112
        %v566 = vpop.permute.xlu0 %565
        %v568 = vsel %vm515, %v564, 0
        %v571 = vsel %vm515, %v566, 0
        %573 = vmatpush.bf16.xpose.msra.mxu0 0
        %574 = vmatpush.bf16.xpose.msra.mxu0 0
        %575 = vmatpush.bf16.xpose.msra.mxu0 0
        %576 = vmatpush.bf16.xpose.msra.mxu0 0
        %577 = vmatpush.bf16.xpose.msra.mxu0 0
        %578 = vmatpush.bf16.xpose.msra.mxu0 0
        %579 = vmatpush.bf16.xpose.msra.mxu0 0
        %580 = vmatpush.bf16.xpose.msra.mxu0 %v571
        %581 = vmatmul.bf16.gmra.mxu0 %v568
        %v582 = vpop.f32.mrf.mxu0
        %v583 = vadd.f32 0.0, %v582
        %v584 = vpop.f32.mrf.mxu0
        %v585 = vadd.f32 0.0, %v584
        %586 = vdwg.mxu0
        %587 = vrot.lane.b32.xlu0 %v514, 104
        %v588 = vpop.permute.xlu0 %587
        %589 = vrot.lane.b32.xlu0 %v540, 104
        %v590 = vpop.permute.xlu0 %589
        %v592 = vsel %vm515, %v588, 0
        %v595 = vsel %vm515, %v590, 0
        %597 = vmatpush.bf16.xpose.msra.mxu0 0
        %598 = vmatpush.bf16.xpose.msra.mxu0 0
        %599 = vmatpush.bf16.xpose.msra.mxu0 0
        %600 = vmatpush.bf16.xpose.msra.mxu0 0
        %601 = vmatpush.bf16.xpose.msra.mxu0 0
        %602 = vmatpush.bf16.xpose.msra.mxu0 0
        %603 = vmatpush.bf16.xpose.msra.mxu0 0
        %604 = vmatpush.bf16.xpose.msra.mxu0 %v595
        %605 = vmatmul.bf16.gmra.mxu0 %v592
        %v606 = vpop.f32.mrf.mxu0
        %v607 = vadd.f32 0.0, %v606
        %v608 = vpop.f32.mrf.mxu0
        %v609 = vadd.f32 0.0, %v608
        %610 = vdwg.mxu0
        %v611 = vmax.f32 %v532, %v559
        %v612 = vmax.f32 %v534, %v561
        %v613 = vmax.f32 %v611, %v583
        %v614 = vmax.f32 %v612, %v585
        %v615 = vmax.f32 %v613, %v607
        %v616 = vmax.f32 %v614, %v609
        %v617 = vsub.f32 %v532, %v615
        %v618 = vsub.f32 %v534, %v616
        %v619 = vmul.f32 %v617, 1.442695
        %v620 = vpow.pop %v619
        %v621 = vmul.f32 %v618, 1.442695
        %v622 = vpow.pop %v621
        %v623 = vsub.f32 %v559, %v615
        %v624 = vsub.f32 %v561, %v616
        %v625 = vmul.f32 %v623, 1.442695
        %v626 = vpow.pop %v625
        %v627 = vmul.f32 %v624, 1.442695
        %v628 = vpow.pop %v627
        %v629 = vsub.f32 %v583, %v615
        %v630 = vsub.f32 %v585, %v616
        %v631 = vmul.f32 %v629, 1.442695
        %v632 = vpow.pop %v631
        %v633 = vmul.f32 %v630, 1.442695
        %v634 = vpow.pop %v633
        %v635 = vsub.f32 %v607, %v615
        %v636 = vsub.f32 %v609, %v616
        %v637 = vmul.f32 %v635, 1.442695
        %v638 = vpow.pop %v637
        %v639 = vmul.f32 %v636, 1.442695
        %v640 = vpow.pop %v639
        %v641 = vadd.f32 %v620, %v626
        %v642 = vadd.f32 %v622, %v628
        %v643 = vadd.f32 %v641, %v632
        %v644 = vadd.f32 %v642, %v634
        %v645 = vadd.f32 %v643, %v638
        %v646 = vadd.f32 %v644, %v640
        %v647 = vrcp.pop %v645
        %v648 = vrcp.pop %v646
        %v649 = vmul.f32 %v620, %v647
        %v650 = vmul.f32 %v622, %v648
        %v651 = vpack.c.bf16 %v650, %v649
        %652 = vrot.lane.b32.xlu0 %v540, 96
        %v653 = vpop.permute.xlu0 %652
        %v655 = vsel %vm515, %v651, 0
        %vm657 = vcmask 1043456
        %v659 = vsel %vm657, %v653, 0
        %661 = vmatpush.bf16.msra.mxu0 0
        %662 = vmatpush.bf16.msra.mxu0 0
        %663 = vmatpush.bf16.msra.mxu0 0
        %664 = vmatpush.bf16.msra.mxu0 0
        %665 = vmatpush.bf16.msra.mxu0 0
        %666 = vmatpush.bf16.msra.mxu0 0
        %667 = vmatpush.bf16.msra.mxu0 0
        %668 = vmatpush.bf16.msra.mxu0 %v659
        %669 = vmatmul.bf16.gmra.mxu0 %v655
        %v670 = vpop.f32.mrf.mxu0
        %v671 = vadd.f32 0.0, %v670
        %v672 = vpop.f32.mrf.mxu0
        %v673 = vadd.f32 0.0, %v672
        %674 = vdwg.mxu0
        %v675 = vmul.f32 %v626, %v647
        %v676 = vmul.f32 %v628, %v648
        %v677 = vpack.c.bf16 %v676, %v675
        %678 = vrot.lane.b32.xlu0 %v540, 88
        %v679 = vpop.permute.xlu0 %678
        %v681 = vsel %vm515, %v677, 0
        %v684 = vsel %vm657, %v679, 0
        %686 = vmatpush.bf16.msra.mxu0 0
        %687 = vmatpush.bf16.msra.mxu0 0
        %688 = vmatpush.bf16.msra.mxu0 0
        %689 = vmatpush.bf16.msra.mxu0 0
        %690 = vmatpush.bf16.msra.mxu0 0
        %691 = vmatpush.bf16.msra.mxu0 0
        %692 = vmatpush.bf16.msra.mxu0 0
        %693 = vmatpush.bf16.msra.mxu0 %v684
        %694 = vmatmul.bf16.gmra.mxu0 %v681
        %v695 = vpop.f32.mrf.mxu0
        %v696 = vadd.f32 0.0, %v695
        %v697 = vpop.f32.mrf.mxu0
        %v698 = vadd.f32 0.0, %v697
        %699 = vdwg.mxu0
        %v700 = vmul.f32 %v632, %v647
        %v701 = vmul.f32 %v634, %v648
        %v702 = vpack.c.bf16 %v701, %v700
        %703 = vrot.lane.b32.xlu0 %v540, 80
        %v704 = vpop.permute.xlu0 %703
        %v706 = vsel %vm515, %v702, 0
        %v709 = vsel %vm657, %v704, 0
        %711 = vmatpush.bf16.msra.mxu0 0
        %712 = vmatpush.bf16.msra.mxu0 0
        %713 = vmatpush.bf16.msra.mxu0 0
        %714 = vmatpush.bf16.msra.mxu0 0
        %715 = vmatpush.bf16.msra.mxu0 0
        %716 = vmatpush.bf16.msra.mxu0 0
        %717 = vmatpush.bf16.msra.mxu0 0
        %718 = vmatpush.bf16.msra.mxu0 %v709
        %719 = vmatmul.bf16.gmra.mxu0 %v706
        %v720 = vpop.f32.mrf.mxu0
        %v721 = vadd.f32 0.0, %v720
        %v722 = vpop.f32.mrf.mxu0
        %v723 = vadd.f32 0.0, %v722
        %724 = vdwg.mxu0
        %v725 = vmul.f32 %v638, %v647
        %v726 = vmul.f32 %v640, %v648
        %v727 = vpack.c.bf16 %v726, %v725
        %728 = vrot.lane.b32.xlu0 %v540, 72
        %v729 = vpop.permute.xlu0 %728
        %v731 = vsel %vm515, %v727, 0
        %v734 = vsel %vm657, %v729, 0
        %736 = vmatpush.bf16.msra.mxu0 0
        %737 = vmatpush.bf16.msra.mxu0 0
        %738 = vmatpush.bf16.msra.mxu0 0
        %739 = vmatpush.bf16.msra.mxu0 0
        %740 = vmatpush.bf16.msra.mxu0 0
        %741 = vmatpush.bf16.msra.mxu0 0
        %742 = vmatpush.bf16.msra.mxu0 0
        %743 = vmatpush.bf16.msra.mxu0 %v734
        %744 = vmatmul.bf16.gmra.mxu0 %v731
        %v745 = vpop.f32.mrf.mxu0
        %v746 = vadd.f32 0.0, %v745
        %v747 = vpop.f32.mrf.mxu0
        %v748 = vadd.f32 0.0, %v747
        %749 = vdwg.mxu0
        %752 = vrot.lane.b32.xlu0 %v696, 8
        %v753 = vpop.permute.xlu0 %752
        %754 = vrot.lane.b32.xlu0 %v698, 8
        %v755 = vpop.permute.xlu0 %754
        %760 = vrot.lane.b32.xlu0 %v721, 16
        %v761 = vpop.permute.xlu0 %760
        %762 = vrot.lane.b32.xlu0 %v723, 16
        %v763 = vpop.permute.xlu0 %762
        %768 = vrot.lane.b32.xlu0 %v746, 24
        %v769 = vpop.permute.xlu0 %768
        %770 = vrot.lane.b32.xlu0 %v748, 24
        %v771 = vpop.permute.xlu0 %770
        %v774 = vsel %vm515, %v671, %v753
        %v775 = vsel %vm515, %v673, %v755
        %v776 = vsel %vm492, %v774, %v761
        %v777 = vsel %vm492, %v775, %v763
        %vm778 = vcmask 195584
        %v779 = vsel %vm778, %v776, %v769
        %v780 = vsel %vm778, %v777, %v771
        %v781 = vpack.c.bf16 %v780, %v779
        %v782 = vld [vmem:[#allocation10] sm:$0xf]
        %v783 = vld [vmem:[#allocation10 + $0x4] sm:$0xf]
        %v784 = vld [vmem:[#allocation10 + $0x8] sm:$0xf]
        %v785 = vld [vmem:[#allocation10 + $0xc] sm:$0xf]
        %v786 = vld [vmem:[%s7] sm:$0x1]
        %v788 = vperm.slane %v786, 0
        %v794 = vunpack.c.l.b16 %v782
        %v795 = vunpack.c.l.b16 %v783
        %v796 = vunpack.c.l.b16 %v784
        %v797 = vunpack.c.l.b16 %v785
        %v798 = vpack.c.b16 %v795, %v794
        %v799 = vpack.c.b16 %v797, %v796
        %v803 = vsel %vm460, %v781, 0
        %805 = vmatpush.bf16.msra.mxu0 0
        %806 = vmatpush.bf16.msra.mxu0 0
        %807 = vmatpush.bf16.msra.mxu0 0
        %808 = vmatpush.bf16.msra.mxu0 0
        %809 = vmatpush.bf16.msra.mxu0 0
        %810 = vmatpush.bf16.msra.mxu0 0
        %811 = vmatpush.bf16.msra.mxu0 %v799
        %812 = vmatpush.bf16.msra.mxu0 %v798
        %813 = vmatmul.bf16.gmra.mxu0 %v803
        %v814 = vpop.f32.mrf.mxu0
        %v815 = vadd.f32 %v788, %v814
        %v816 = vpop.f32.mrf.mxu0
        %v817 = vadd.f32 %v788, %v816
        %818 = vdwg.mxu0
        %819 = vst.msk [vmem:[%s431] sm:$0xff] %vm460, %v815
        %820 = vst.msk [vmem:[%s431 + $0x8] sm:$0xff] %vm460, %v817
        %s821 = sand.u32 %s231, 1
        %s822 = scalar_lea.sflag [#allocation4], %s821
        %s823 = sand.u32 %s231, 1
        %s824 = smul.addr %s823, 16
        %s825 = scalar_lea.vmem [#allocation11], %s824
        // Predicated region
        $region73: #{tpu_custom_call.1} parent=51 // pred_check
          %p826 = pneg %p241
        $region74: #{tpu_custom_call.1} parent=51 // pred_check_branch
          %828 = sbr.rel (%p826) target = $region76
        $region75: #{tpu_custom_call.1} parent=51 // pred_region
          %s829 = smul.u32 2, %s34
          %831 = vsyncadd %s822, 0
          %s832 = smul.addr %s33, 2
          %s833 = sadd.s32 %s829, %s832
          %s834 = smul.addr %s833, 8
          %s835 = scalar_lea.hbm %s8, %s834
          %s836 = sshll.u32 %s825, 4
          %s837 = int_to_ptr.vmem [resolvable:$true] %s836
          %s838 = sshll.u32 %s835, 4
          %s839 = int_to_ptr.hbm [resolvable:$true] %s838
          %844 = dma.vmem_to_hbm [thread:$0]  %s837, 256, %s839, %s822, 128, 128, 8
        $region76: #{tpu_custom_call.1} parent=51 // pred_fallthru
          _
      $region52: #{tpu_custom_call.1} parent=5 // pred_fallthru
        _
      %p845 = scmp.le.s32.totalorder 2, %s24
      // Predicated region
      $region77: #{tpu_custom_call.1} parent=5 // pred_check
        %p846 = pneg %p845
      $region78: #{tpu_custom_call.1} parent=5 // pred_check_branch
        %848 = sbr.rel (%p846) target = $region80
      $region79: #{tpu_custom_call.1} parent=5 // pred_region
        %s849 = ssub.s32 %s24, 2
        // Predicated region
        $region81: #{tpu_custom_call.1} parent=79 // pred_check
          %p850 = pneg %p247
        $region82: #{tpu_custom_call.1} parent=79 // pred_check_branch
          %852 = sbr.rel (%p850) target = $region84
        $region83: #{tpu_custom_call.1} parent=79 // pred_region
          %s853 = sand.u32 %s232, 1
          %s854 = scalar_lea.sflag [#allocation4], %s853
          %s855 = sand.u32 %s232, 1
          %s856 = smul.addr %s855, 16
          %s857 = scalar_lea.vmem [#allocation11], %s856
          %859 = dma.done %s854, 256
        $region84: #{tpu_custom_call.1} parent=79 // pred_fallthru
          _
      $region80: #{tpu_custom_call.1} parent=5 // pred_fallthru
        _
    $region6: #{tpu_custom_call.1} parent=1 // loop_footer
      %s28 = sadd.s32 1, %s24
    $region7: #{tpu_custom_call.1} parent=1 // loop_footer_branch
      %23 = sbr.rel target = $region3
    $region8: #{tpu_custom_call.1} parent=1 // loop_exit
      _
    %860 = vsyncpa [#allocation3], 1
    %s861 = scalar_lea.sflag [#allocation3], 1
    %862 = vsyncpa %s861, 1
    %863 = vsyncpa [#allocation6], 1
    %s864 = scalar_lea.sflag [#allocation6], 1
    %865 = vsyncpa %s864, 1
    %866 = vsyncpa [#allocation9], 1
    %867 = vsyncpa [#allocation4], 1
    %s868 = scalar_lea.sflag [#allocation4], 1
    %869 = vsyncpa %s868, 1

</llo_original>
